<compile_context>
chip_gen: v6e
topology: v6e:2x2x1
jax: 0.10.0
libtpu: 0.0.40
codegen_flags: <defaults>
</compile_context>

<pallas_src>
import functools

import jax
import jax.numpy as jnp
import numpy as np
from jax.experimental import pallas as pl
from jax.experimental.pallas import tpu as pltpu


# --------------------------------------------------------------------------- #
# Kernels
# --------------------------------------------------------------------------- #

def _gtl_kernel(x_ref, w_ref, bias_ref, out_ref):
    # x_ref:    VMEM (TB, D)   batch rows on sublanes, flattened features on lanes
    # w_ref:    VMEM (1, D)    batch-independent fused weight row
    # bias_ref: SMEM (1,)      fused bias  b * sum(W_norm) == b
    # out_ref:  VMEM (TB, 1)   one scalar per batch row
    x = x_ref[...].astype(jnp.float32)
    w = w_ref[...].astype(jnp.float32)
    out_ref[...] = jnp.sum(x * w, axis=-1, keepdims=True) - bias_ref[0]


def _gtl_kernel_split(d_total, d_chunk, x_ref, w_ref, bias_ref, out_ref):
    # Feature-split variant (large-D guard): grid = (batch blocks, feature chunks)
    # with the reduction (feature) axis last; accumulate directly into the
    # resident (TB, 1) output block.
    j = pl.program_id(1)

    @pl.when(j == 0)
    def _():
        out_ref[...] = jnp.zeros_like(out_ref)

    prod = x_ref[...].astype(jnp.float32) * w_ref[...].astype(jnp.float32)
    if d_total % d_chunk != 0:
        # Mask out-of-bounds lanes of the partial last chunk so garbage reads
        # cannot contaminate the reduction (batch-partial rows need no masking:
        # their output writes are dropped).
        lane = jax.lax.broadcasted_iota(jnp.int32, prod.shape, dimension=1)
        prod = jnp.where(j * d_chunk + lane < d_total, prod, 0.0)
    out_ref[...] += jnp.sum(prod, axis=-1, keepdims=True)

    @pl.when(j == pl.num_programs(1) - 1)
    def _():
        out_ref[...] -= bias_ref[0]


# --------------------------------------------------------------------------- #
# Helpers
# --------------------------------------------------------------------------- #

def _round_up(a, m):
    return ((a + m - 1) // m) * m


def _round_down(a, m):
    return (a // m) * m


def _cdiv(a, m):
    return (a + m - 1) // m


def _vmem_capacity_bytes():
    try:
        return int(pltpu.get_tpu_info().vmem_capacity_bytes)
    except Exception:
        return 64 << 20   # conservative fallback (v7x per-TC VMEM)


def _num_tensorcores():
    try:
        info = pltpu.get_tpu_info()
        for name in ("num_cores", "num_cores_per_chip", "tensorcore_count", "core_count"):
            v = getattr(info, name, None)
            if v:
                return int(v)
    except Exception:
        pass
    return 1


def _batch_dim_semantics(num_batch_blocks):
    # v7x has 2 TensorCores per chip sharing 3.2 TB/s HBM: CORE_PARALLEL splits
    # the batch-block axis so each TC streams a disjoint slice of x. On 1-TC
    # chips (v5e/v6e) fall back to plain PARALLEL.
    n_cores = _num_tensorcores()
    if (n_cores > 1 and num_batch_blocks >= n_cores
            and num_batch_blocks % n_cores == 0):
        return pltpu.CORE_PARALLEL
    return pltpu.PARALLEL


def make_params(T, M, n, key):
    kb, kk1, kk2, kk3, kk4 = jax.random.split(key, 5)
    return dict(
        t=1e-5 * jnp.ones((M, 1), jnp.float32),
        A1=0.5 * jnp.ones((7, 1), jnp.float32),
        A2=0.5 * jnp.ones((8, 1), jnp.float32),
        b=1e-5 * jax.random.normal(kb, (1, 1), dtype=jnp.float32),
        A_n=0.5 * jnp.ones((1, n + 1), jnp.float32),
        A_disj=0.5 * jnp.ones((2, 1, 1), jnp.float32),
        k1=1e-5 * jax.random.normal(kk1, (1, 1), dtype=jnp.float32),
        k2=1e-5 * jax.random.normal(kk2, (1, 1), dtype=jnp.float32),
        k3=1e-5 * jax.random.normal(kk3, (1, 1), dtype=jnp.float32),
        k4=1e-5 * jax.random.normal(kk4, (1, 1), dtype=jnp.float32),
        T=T,
    )


def _fused_weights(params, n):
    """Hoist the batch-independent softmax chain of the torch forward into one
    (1, 15*(n+1)*M) weight row and a scalar bias (done once, outside the kernel)."""
    M = params["t"].shape[0]
    NP1 = n + 1

    A1c = jnp.concatenate([params["A1"], jnp.zeros((8, 1), jnp.float32)], axis=0)  # (15,1)
    A2c = jnp.concatenate([jnp.zeros((7, 1), jnp.float32), params["A2"]], axis=0)  # (15,1)
    A_sm1 = jnp.abs(A1c) / jnp.sum(jnp.abs(A1c))
    A_sm2 = jnp.abs(A2c) / jnp.sum(jnp.abs(A2c))
    A_n_sm = jnp.abs(params["A_n"]) / jnp.sum(jnp.abs(params["A_n"]))              # (1, n+1)
    A_disj_sm = jnp.abs(params["A_disj"]) / jnp.sum(jnp.abs(params["A_disj"]))     # (2,1,1)

    # torch: F.softmax(r_a, dim=1) is over a singleton dim == 1, so tmp_sftmaxK = kK.
    g1 = params["k1"] * jax.nn.softmax(params["k3"] * A_sm1, axis=0) * A_n_sm      # (15, n+1)
    g2 = params["k2"] * jax.nn.softmax(params["k4"] * A_sm2, axis=0) * A_n_sm      # (15, n+1)

    cat = jnp.stack([g1, -g2], axis=0)                                             # (2,15,n+1)
    xs = jax.nn.softmax(cat, axis=0) * A_disj_sm.reshape(2, 1, 1)
    W = xs[0] + xs[1]                                                              # (15, n+1)
    W_norm = W / jnp.sum(W)

    t_row = params["t"].reshape(1, 1, M).astype(jnp.float32)
    w = (W_norm[:, :, None] * t_row).reshape(1, 15 * NP1 * M)                      # (1, D)
    bias = (params["b"] * jnp.sum(W_norm)).reshape(1)                              # (1,)
    return w.astype(jnp.float32), bias.astype(jnp.float32)


# --------------------------------------------------------------------------- #
# Wrapper
# --------------------------------------------------------------------------- #

def gtl_forward_pallas(x, params, n, *, block_bytes=8 << 20, feature_chunk=None):
    """x: (B, 15, n+1, M) (PyTorch layout), f32 or bf16.  Returns (B,) float32."""
    B = x.shape[0]
    NP1 = n + 1
    M = params["t"].shape[0]
    assert x.shape == (B, 15, NP1, M)
    D = 15 * NP1 * M

    w, bias = _fused_weights(params, n)
    x_flat = x.reshape(B, D)                    # native layout; reshape is free, no pad

    itemsize = x_flat.dtype.itemsize
    vmem_cap = _vmem_capacity_bytes()
    # Generation-aware per-buffer budget: double-buffered x (+ w / out buffers)
    # must fit VMEM on every generation (64 MiB per TC on v7x, 128 MiB on v5e/v6e).
    per_buf_budget = min(block_bytes, vmem_cap // 8)

    d_lanes_full = _round_up(D, 128)            # VMEM lane padding of a full-D block
    if feature_chunk is not None:
        d_chunk = min(int(feature_chunk), D)
        if d_chunk < D:
            d_chunk = max(128, _round_down(d_chunk, 128))
    elif 8 * d_lanes_full * itemsize <= per_buf_budget:
        d_chunk = D                             # full-D blocks (common case)
    else:
        # Large-D guard: split the feature axis, keeping >=64 batch rows per block.
        d_chunk = max(128, _round_down(per_buf_budget // (64 * itemsize), 128))

    chunk_lanes = d_lanes_full if d_chunk == D else d_chunk
    tb = per_buf_budget // (chunk_lanes * itemsize)
    tb = max(8, _round_down(tb, 8))
    tb = min(tb, _round_up(B, 8))               # don't over-allocate for small batches
    num_b = _cdiv(B, tb)
    num_d = _cdiv(D, d_chunk)

    # Explicit scoped-VMEM limit: double-buffered x/w/out plus slack, clamped to
    # a safe fraction of physical VMEM.
    x_buf = tb * chunk_lanes * itemsize
    w_buf = 8 * chunk_lanes * 4
    out_buf = tb * 128 * 4
    need = 2 * (x_buf + w_buf + out_buf) + (1 << 20)
    vmem_limit = int(min(vmem_cap * 3 // 4, max(need, 32 << 20)))

    batch_sem = _batch_dim_semantics(num_b)

    if num_d == 1:
        grid = (num_b,)
        in_specs = [
            pl.BlockSpec((tb, D), lambda i: (i, 0)),
            pl.BlockSpec((1, D), lambda i: (0, 0)),
            pl.BlockSpec((1,), lambda i: (0,), memory_space=pltpu.MemorySpace.SMEM),
        ]
        out_specs = pl.BlockSpec((tb, 1), lambda i: (i, 0))
        kernel = _gtl_kernel
        dim_sem = (batch_sem,)
    else:
        grid = (num_b, num_d)                   # reduction (feature) axis last
        in_specs = [
            pl.BlockSpec((tb, d_chunk), lambda i, j: (i, j)),
            pl.BlockSpec((1, d_chunk), lambda i, j: (0, j)),
            pl.BlockSpec((1,), lambda i, j: (0,), memory_space=pltpu.MemorySpace.SMEM),
        ]
        out_specs = pl.BlockSpec((tb, 1), lambda i, j: (i, 0))
        kernel = functools.partial(_gtl_kernel_split, D, d_chunk)
        dim_sem = (batch_sem, pltpu.ARBITRARY)

    out = pl.pallas_call(
        kernel,
        out_shape=jax.ShapeDtypeStruct((B, 1), jnp.float32),
        grid=grid,
        in_specs=in_specs,
        out_specs=out_specs,
        compiler_params=pltpu.CompilerParams(
            dimension_semantics=dim_sem,
            vmem_limit_bytes=vmem_limit),
    )(x_flat, w, bias)

    return out[:, 0]


def gtl_forward_ref(x, params, n):
    """Pure-JAX mirror of the torch forward, for correctness checking."""
    t, b = params["t"], params["b"]
    A1c = jnp.concatenate([params["A1"], jnp.zeros((8, 1), jnp.float32)], axis=0)
    A2c = jnp.concatenate([jnp.zeros((7, 1), jnp.float32), params["A2"]], axis=0)
    r_a = (jnp.matmul(x, t) - b).reshape(-1, 1, 15, n + 1)
    A_sm1 = jnp.abs(A1c) / jnp.sum(jnp.abs(A1c))
    A_sm2 = jnp.abs(A2c) / jnp.sum(jnp.abs(A2c))
    A_n_sm = jnp.abs(params["A_n"]) / jnp.sum(jnp.abs(params["A_n"]))
    tmp1 = params["k3"] * jax.nn.softmax(r_a, axis=1)
    tmp2 = params["k4"] * jax.nn.softmax(r_a, axis=1)
    g1 = params["k1"] * jax.nn.softmax(tmp1 * A_sm1, axis=2) * A_n_sm
    g2 = params["k2"] * jax.nn.softmax(tmp2 * A_sm2, axis=2) * A_n_sm
    A_disj_sm = jnp.abs(params["A_disj"]) / jnp.sum(jnp.abs(params["A_disj"]))
    cat = jnp.concatenate([g1, -g2], axis=1)
    xs = jax.nn.softmax(cat, axis=1) * A_disj_sm
    wsx = xs * r_a
    weisum = jnp.sum(xs, axis=(1, 2, 3))
    return jnp.sum(wsx, axis=(1, 2, 3)) / weisum


if __name__ == "__main__":
    T, M, n = 15, 5, 3
    key = jax.random.PRNGKey(0)
    kp, kx1, kx2, kx3 = jax.random.split(key, 4)
    params = make_params(T, M, n, kp)

    # 1) Small batch: single partial block, no wrapper-side padding of x.
    B1 = 2
    x1 = jax.random.normal(kx1, (B1, 15, n + 1, M), dtype=jnp.float32)
    out1 = jax.block_until_ready(gtl_forward_pallas(x1, params, n))
    assert out1.shape == (B1,)
    np.testing.assert_allclose(np.asarray(out1),
                               np.asarray(gtl_forward_ref(x1, params, n)),
                               rtol=1e-4, atol=1e-8)

    # 2) Larger batch with the default (large) block: single streaming pass.
    B2 = 300
    x2 = jax.random.normal(kx2, (B2, 15, n + 1, M), dtype=jnp.float32)
    out2 = jax.block_until_ready(gtl_forward_pallas(x2, params, n))
    assert out2.shape == (B2,)
    ref2 = gtl_forward_ref(x2, params, n)
    np.testing.assert_allclose(np.asarray(out2), np.asarray(ref2),
                               rtol=1e-4, atol=1e-8)

    # 3) Same batch with a small forced block: multi-grid-step path with a
    #    partial (OOB-masked) last batch block — still no pad copy of x.
    out3 = jax.block_until_ready(
        gtl_forward_pallas(x2, params, n, block_bytes=64 << 10))
    np.testing.assert_allclose(np.asarray(out3), np.asarray(out2),
                               rtol=1e-5, atol=1e-9)

    # 4) Forced feature-split path (guard for very large D): exercises the
    #    trailing "arbitrary" reduction axis and partial-chunk lane masking.
    B3 = 64
    x3 = jax.random.normal(kx3, (B3, 15, n + 1, M), dtype=jnp.float32)
    out4 = jax.block_until_ready(
        gtl_forward_pallas(x3, params, n, feature_chunk=128))
    np.testing.assert_allclose(np.asarray(out4),
                               np.asarray(gtl_forward_ref(x3, params, n)),
                               rtol=1e-4, atol=1e-8)

    print("KERNEL_OK")
</pallas_src>

<mosaic_0001>
module attributes {stable_mosaic.version = 11 : i64} {
  func.func @_gtl_kernel(%arg0: i32, %arg1: memref<8x300xf32, #tpu.memory_space<vmem>>, %arg2: memref<1x300xf32, #tpu.memory_space<vmem>>, %arg3: memref<1xf32, #tpu.memory_space<smem>>, %arg4: memref<8x1xf32, #tpu.memory_space<vmem>>) attributes {dimension_semantics = [#tpu.dimension_semantics<parallel>], iteration_bounds = array<i64: 1>, scalar_prefetch = 0 : i64, scratch_operands = 0 : i64, tpu.core_type = #tpu.core_type<tc>, window_params = [{transform_indices = @transform_0, window_bounds = array<i64: 8, 300>}, {pipeline_mode = #tpu.pipeline_mode<synchronous>, transform_indices = @transform_1, window_bounds = array<i64: 1, 300>}, {transform_indices = @transform_2, window_bounds = array<i64: 1>}, {transform_indices = @transform_3, window_bounds = array<i64: 8, 1>}]} {
    %c0 = arith.constant 0 : index
    %c0_0 = arith.constant 0 : index
    %0 = vector.load %arg1[%c0, %c0_0] : memref<8x300xf32, #tpu.memory_space<vmem>>, vector<8x300xf32>
    %c0_1 = arith.constant 0 : index
    %c0_2 = arith.constant 0 : index
    %1 = vector.load %arg2[%c0_1, %c0_2] : memref<1x300xf32, #tpu.memory_space<vmem>>, vector<1x300xf32>
    %2 = vector.broadcast %1 : vector<1x300xf32> to vector<8x300xf32>
    %3 = arith.mulf %0, %2 : vector<8x300xf32>
    %cst = arith.constant dense<0.000000e+00> : vector<8xf32>
    %4 = vector.multi_reduction <add>, %3, %cst [1] : vector<8x300xf32> to vector<8xf32>
    %5 = vector.shape_cast %4 : vector<8xf32> to vector<8x1xf32>
    %c0_3 = arith.constant 0 : index
    %6 = memref.load %arg3[%c0_3] : memref<1xf32, #tpu.memory_space<smem>>
    %7 = vector.broadcast %6 : f32 to vector<8x1xf32>
    %8 = arith.subf %5, %7 : vector<8x1xf32>
    %c0_4 = arith.constant 0 : index
    %c0_5 = arith.constant 0 : index
    %9 = vector.load %arg4[%c0_4, %c0_5] : memref<8x1xf32, #tpu.memory_space<vmem>>, vector<8x1xf32>
    tpu.vector_store %arg4[%c0_4, %c0_5], %8 {strides = array<i32>} : memref<8x1xf32, #tpu.memory_space<vmem>>, vector<8x1xf32>,
    return
  }
  func.func @transform_0(%arg0: i32) -> (i32, i32) {
    %c0_i32 = arith.constant 0 : i32
    %c0_i32_0 = arith.constant 0 : i32
    return %arg0, %c0_i32 : i32, i32
  }
  func.func @transform_1(%arg0: i32) -> (i32, i32) {
    %c0_i32 = arith.constant 0 : i32
    %c0_i32_0 = arith.constant 0 : i32
    %c0_i32_1 = arith.constant 0 : i32
    return %c0_i32, %c0_i32_0 : i32, i32
  }
  func.func @transform_2(%arg0: i32) -> i32 {
    %c0_i32 = arith.constant 0 : i32
    %c0_i32_0 = arith.constant 0 : i32
    return %c0_i32 : i32
  }
  func.func @transform_3(%arg0: i32) -> (i32, i32) {
    %c0_i32 = arith.constant 0 : i32
    %c0_i32_0 = arith.constant 0 : i32
    return %arg0, %c0_i32 : i32, i32
  }
}

</mosaic_0001>

<llo_original>
// kernel: tpu_custom_call.1
$region0: #{tpu_custom_call.1}
  #allocation0 [shape = 'u32[]', space=smem, size = 0x4, offset = 0x4, fixed_abs, tag = 'smem constant byte address 0x4 - core index']
  #allocation1 [shape = 'u32[144,128]{1,0:T(1,128)}', space=vmem, size = 0x12000, scoped, tag = 'internal scratch']
  #allocation2 [shape = 'f32[1]{0:T(128)S(6)}', space=smem, size = 0x200, scoped, tag = 'scoped memory for tpu_custom_call.1']
  %s0 = inlined_call_operand.hbm [shape: f32[2,300], index: 0, kind: input, shape index: {}]
  %s1 = inlined_call_operand.vmem [shape: f32[1,300], index: 1, kind: input, shape index: {}]
  %s2 = inlined_call_operand.<no memory space> [shape: f32[1], index: 2, kind: input, shape index: {}]
  %s3 = inlined_call_operand.vmem [shape: f32[2,1], index: 3, kind: output, shape index: {}]
  %s4 = sld [smem:[#allocation0]]
  $region56: #{tpu_custom_call.1} parent=0
    _
  %s6 = ssub.s32 1, %s4
  %s7 = scalar_select 0, %s6, %s4
  %8 = sst [smem:[#allocation2]] %s2
  $region1: #{tpu_custom_call.1} parent=0
    #allocation3 [shape = 'u8[12288]{0}', space=vmem, size = 0x3000, scoped, tag = 'input window, operand 0, single buffered']
    #allocation4 [shape = 's32[1]{0}', space=sflag, size = 0x4, scoped, tag = 'scoped memory for tpu_custom_call.1']
    #allocation5 [shape = 'u8[4096]{0}', space=vmem, size = 0x1000, scoped, tag = 'output window, operand 0, single buffered']
    %9 = vsyncpa [#allocation4], 0
    // Predicated region
    $region2: #{tpu_custom_call.1} parent=1 // pred_check
      _
    $region3: #{tpu_custom_call.1} parent=1 // pred_check_branch
      %11 = sbr.rel (0) target = $region5
    $region4: #{tpu_custom_call.1} parent=1 // pred_region
      %s13 = ssub.s32 384, 96
      %14 = vsyncadd [#allocation4], %s13
      %s15 = sshll.u32 [#allocation3], 4
      %s16 = int_to_ptr.vmem [resolvable:$true] %s15
      %21 = dma.hbm_to_vmem [thread:$0]  %s0, 96, %s16, [#allocation4], 96, 96, 6
    $region5: #{tpu_custom_call.1} parent=1 // pred_fallthru
      _
    // Predicated region
    $region6: #{tpu_custom_call.1} parent=1 // pred_check
      _
    $region7: #{tpu_custom_call.1} parent=1 // pred_check_branch
      %23 = sbr.rel (0) target = $region9
    $region8: #{tpu_custom_call.1} parent=1 // pred_region
      _
    $region9: #{tpu_custom_call.1} parent=1 // pred_fallthru
      _
    // Predicated region
    $region10: #{tpu_custom_call.1} parent=1 // pred_check
      _
    $region11: #{tpu_custom_call.1} parent=1 // pred_check_branch
      %25 = sbr.rel (0) target = $region13
    $region12: #{tpu_custom_call.1} parent=1 // pred_region
      _
    $region13: #{tpu_custom_call.1} parent=1 // pred_fallthru
      _
    // Predicated region
    $region14: #{tpu_custom_call.1} parent=1 // pred_check
      _
    $region15: #{tpu_custom_call.1} parent=1 // pred_check_branch
      %27 = sbr.rel (0) target = $region17
    $region16: #{tpu_custom_call.1} parent=1 // pred_region
      %28 = dma.done [#allocation4], 384
    $region17: #{tpu_custom_call.1} parent=1 // pred_fallthru
      _
    %v29 = vld [vmem:[#allocation3] sm:$0x3f]
    %v30 = vld [vmem:[#allocation3 + $0x6] sm:$0x3f]
    %v31 = vld [vmem:[#allocation3 + $0xc] sm:$0x3f]
    %v32 = vld [vmem:[#allocation3 + $0x12] sm:$0x3f]
    %v33 = vld [vmem:[%s1] sm:$0x7]
    %v35 = vlaneseq
    %v36 = vshrl.u32 %v35, 7
    %v37 = vsub.s32 0, %v36
    %v38 = vrot.slane %v33, %v37
    %v39 = vlaneseq
    %v40 = vshrl.u32 %v39, 7
    %v41 = vsub.s32 1, %v40
    %v42 = vrot.slane %v33, %v41
    %v43 = vlaneseq
    %v44 = vshrl.u32 %v43, 7
    %v45 = vsub.s32 2, %v44
    %v46 = vrot.slane %v33, %v45
    %v47 = vcombine.low %v38, %v42
    %v48 = vcombine.high %v38, %v42
    %v49 = vcombine.high %v46, %v46
    %v51 = vunpack.c.l.s4 1983009808
    %v52 = vunpack.c.0.s8 %v51
    %v53 = vlaneseq
    %v54 = vshrl.u32 %v53, 7
    %v55 = vsub.s32 %v52, %v54
    %v56 = vrot.slane %v47, %v55
    %v58 = vunpack.c.l.s4 1983009808
    %v59 = vunpack.c.0.s8 %v58
    %v60 = vlaneseq
    %v61 = vshrl.u32 %v60, 7
    %v62 = vsub.s32 %v59, %v61
    %v63 = vrot.slane %v48, %v62
    %v65 = vunpack.c.l.s4 1983009808
    %v66 = vunpack.c.0.s8 %v65
    %v67 = vlaneseq
    %v68 = vshrl.u32 %v67, 7
    %v69 = vsub.s32 %v66, %v68
    %v70 = vrot.slane %v46, %v69
    %v72 = vunpack.c.l.s4 1983009808
    %v73 = vunpack.c.0.s8 %v72
    %v74 = vlaneseq
    %v75 = vshrl.u32 %v74, 7
    %v76 = vsub.s32 %v73, %v75
    %v77 = vrot.slane %v49, %v76
    %v78 = vcombine.low %v56, %v70
    %v79 = vcombine.high %v56, %v70
    %v80 = vcombine.low %v63, %v77
    %v81 = vcombine.high %v63, %v77
    %v86 = vmul.f32 %v29, %v78
    %v87 = vmul.f32 %v30, %v79
    %v88 = vmul.f32 %v31, %v80
    %v89 = vmul.f32 %v32, %v81
    %v94 = vcombine.low %v86, %v87
    %v95 = vcombine.high %v86, %v87
    %v96 = vcombine.low %v88, %v89
    %v97 = vcombine.high %v88, %v89
    %v99 = vunpack.c.l.s4 1983009808
    %v100 = vunpack.c.0.s8 %v99
    %v101 = vlaneseq
    %v102 = vshrl.u32 %v101, 7
    %v103 = vsub.s32 %v100, %v102
    %v104 = vrot.slane %v94, %v103
    %v106 = vunpack.c.l.s4 1983009808
    %v107 = vunpack.c.0.s8 %v106
    %v108 = vlaneseq
    %v109 = vshrl.u32 %v108, 7
    %v110 = vsub.s32 %v107, %v109
    %v111 = vrot.slane %v95, %v110
    %v113 = vunpack.c.l.s4 1983009808
    %v114 = vunpack.c.0.s8 %v113
    %v115 = vlaneseq
    %v116 = vshrl.u32 %v115, 7
    %v117 = vsub.s32 %v114, %v116
    %v118 = vrot.slane %v96, %v117
    %v120 = vunpack.c.l.s4 1983009808
    %v121 = vunpack.c.0.s8 %v120
    %v122 = vlaneseq
    %v123 = vshrl.u32 %v122, 7
    %v124 = vsub.s32 %v121, %v123
    %v125 = vrot.slane %v97, %v124
    %v126 = vcombine.low %v104, %v118
    %v127 = vcombine.high %v104, %v118
    %v128 = vcombine.low %v111, %v125
    %v132 = vadd.f32 %v126, %v127
    %vm133 = vcmask 359424
    %v134 = vsel %vm133, %v128, 0.0
    %v135 = vadd.f32 %v132, %v134
    %136 = vadd.xlane.f32.xlu0 %v135
    %v137 = vpop.xlane.xlu0 %136
    %s138 = sld [smem:[#allocation2]]
    %v139 = vstv %s138
    %v140 = vsub.f32 %v137, %v139
    %vm141 = vcmask 7168
    %142 = vst.msk [vmem:[#allocation5] sm:$0xff] %vm141, %v140
    // Predicated region
    $region18: #{tpu_custom_call.1} parent=1 // pred_check
      _
    $region19: #{tpu_custom_call.1} parent=1 // pred_check_branch
      %144 = sbr.rel (0) target = $region21
    $region20: #{tpu_custom_call.1} parent=1 // pred_region
      // Predicated region
      $region22: #{tpu_custom_call.1} parent=20 // pred_check
        _
      $region23: #{tpu_custom_call.1} parent=20 // pred_check_branch
        %146 = sbr.rel (0) target = $region25
      $region24: #{tpu_custom_call.1} parent=20 // pred_region
        // Predicated region
        $region26: #{tpu_custom_call.1} parent=24 // pred_check
          _
        $region27: #{tpu_custom_call.1} parent=24 // pred_check_branch
          %148 = sbr.rel target = $region29
        $region28: #{tpu_custom_call.1} parent=24 // pred_region
          // Predicated region
          $region41: #{tpu_custom_call.1} parent=28 // pred_check
            _
          $region42: #{tpu_custom_call.1} parent=28 // pred_check_branch
            %164 = sbr.rel (0) target = $region44
          $region43: #{tpu_custom_call.1} parent=28 // pred_region
            %s166 = ssub.s32 4, 1
            loop: start=0, step=1, limit=1
            $region45: #{tpu_custom_call.1} parent=43 // loop_pre_header
              _
            $region46: #{tpu_custom_call.1} parent=43 // loop_header
              %s168 = sphi 0, %s172
              %p169 = scmp.ge.s32.totalorder %s168, 1
              %s173 = sphi [#allocation5], [#allocation5]
              %s174 = sphi %s3, %s3
            $region47: #{tpu_custom_call.1} parent=43 // loop_header_branch
              %171 = sbr.rel (%p169) target = $region51
            $region48: #{tpu_custom_call.1} parent=43 // loop_body
              %v175 = vld [vmem:[%s173] sm:%s166]
              %176 = vst [vmem:[%s174] sm:%s166] %v175
            $region49: #{tpu_custom_call.1} parent=43 // loop_footer
              %s172 = sadd.s32 1, %s168
            $region50: #{tpu_custom_call.1} parent=43 // loop_footer_branch
              %167 = sbr.rel target = $region46
            $region51: #{tpu_custom_call.1} parent=43 // loop_exit
              _
          $region44: #{tpu_custom_call.1} parent=28 // pred_fallthru
            _
        $region29: #{tpu_custom_call.1} parent=24 // pred_fallthru
          _
        // Predicated region
        $region30: #{tpu_custom_call.1} parent=24 // pred_check
          _
        $region31: #{tpu_custom_call.1} parent=24 // pred_check_branch
          %150 = sbr.rel (0) target = $region33
        $region32: #{tpu_custom_call.1} parent=24 // pred_region
          %s152 = ssub.s32 4, 1
          loop: start=0, step=1, limit=1
          $region34: #{tpu_custom_call.1} parent=32 // loop_pre_header
            _
          $region35: #{tpu_custom_call.1} parent=32 // loop_header
            %s154 = sphi 0, %s158
            %p155 = scmp.ge.s32.totalorder %s154, 1
            %s159 = sphi [#allocation5], [#allocation5]
            %s160 = sphi %s3, %s3
          $region36: #{tpu_custom_call.1} parent=32 // loop_header_branch
            %157 = sbr.rel (%p155) target = $region40
          $region37: #{tpu_custom_call.1} parent=32 // loop_body
            %v161 = vld [vmem:[%s159] sm:%s152]
            %162 = vst [vmem:[%s160] sm:%s152] %v161
          $region38: #{tpu_custom_call.1} parent=32 // loop_footer
            %s158 = sadd.s32 1, %s154
          $region39: #{tpu_custom_call.1} parent=32 // loop_footer_branch
            %153 = sbr.rel target = $region35
          $region40: #{tpu_custom_call.1} parent=32 // loop_exit
            _
        $region33: #{tpu_custom_call.1} parent=24 // pred_fallthru
          _
      $region25: #{tpu_custom_call.1} parent=20 // pred_fallthru
        _
      %177 = vnop
    $region21: #{tpu_custom_call.1} parent=1 // pred_fallthru
      _
    // Predicated region
    $region52: #{tpu_custom_call.1} parent=1 // pred_check
      _
    $region53: #{tpu_custom_call.1} parent=1 // pred_check_branch
      %179 = sbr.rel (0) target = $region55
    $region54: #{tpu_custom_call.1} parent=1 // pred_region
      _
    $region55: #{tpu_custom_call.1} parent=1 // pred_fallthru
      _
    %180 = vsyncpa [#allocation4], 1

</llo_original>
